<compile_context>
chip_gen: v5e
topology: v5e:2x2
jax: 0.10.0
libtpu: 0.0.40
codegen_flags: <defaults>
</compile_context>

<pallas_src>
import functools

import jax
import jax.numpy as jnp
from jax.experimental import pallas as pl
from jax.experimental.pallas import tpu as pltpu


# ----------------------------------------------------------------------------
# Glue: 1-D linear interpolation weight matrix (PyTorch bilinear semantics).
# ----------------------------------------------------------------------------
def _linear_interp_matrix(in_size: int, out_size: int, align_corners: bool):
    """Dense (out_size, in_size) matrix W s.t. out = W @ in."""
    out_idx = jnp.arange(out_size, dtype=jnp.float32)
    if align_corners:
        if out_size == 1:
            src = jnp.zeros((out_size,), dtype=jnp.float32)
        else:
            src = out_idx * (float(in_size - 1) / float(out_size - 1))
    else:
        scale = float(in_size) / float(out_size)
        src = (out_idx + 0.5) * scale - 0.5
        src = jnp.maximum(src, 0.0)  # PyTorch clamps negative source coords
    lo = jnp.clip(jnp.floor(src).astype(jnp.int32), 0, in_size - 1)
    hi = jnp.minimum(lo + 1, in_size - 1)
    frac = src - lo.astype(jnp.float32)

    w = jnp.zeros((out_size, in_size), dtype=jnp.float32)
    rows = jnp.arange(out_size)
    w = w.at[rows, lo].add(1.0 - frac)
    w = w.at[rows, hi].add(frac)
    return w


# ----------------------------------------------------------------------------
# Generation-aware VMEM budget.
# ----------------------------------------------------------------------------
def _vmem_capacity_bytes():
    try:
        info = pltpu.get_tpu_info()
        cap = int(getattr(info, "vmem_capacity_bytes", 0) or 0)
        if cap > 0:
            return cap
    except Exception:
        pass
    return 128 * 1024 * 1024  # v5e / v6e default


# ----------------------------------------------------------------------------
# Tile sizing: largest channel tile that (a) fits a conservative VMEM budget
# counting lane/sublane padding + f32 intermediates + weights, and (b) keeps
# enough grid steps for pipelining / megacore.
# ----------------------------------------------------------------------------
def _choose_channel_tile(N, C, H, W, H_out, W_out, itemsize, budget_bytes):
    LANE, SUB = 128, 8
    pad_l = lambda n: -(-n // LANE) * LANE
    pad_s = lambda n: -(-n // SUB) * SUB
    per_c = (
        2 * pad_s(H) * pad_l(W) * itemsize            # input block (double buffered)
        + 2 * pad_s(H_out) * pad_l(W_out) * itemsize  # output block (double buffered)
        + pad_s(W) * pad_l(H) * itemsize              # x swapaxes copy
        + pad_s(W) * pad_l(H_out) * 4                 # H-pass result (f32)
        + pad_s(H_out) * pad_l(W) * 4                 # swapaxes copy of it (f32)
        + pad_s(H_out) * pad_l(W_out) * 4             # W-pass result (f32)
        + pad_s(H_out) * pad_l(W_out) * itemsize      # cast value before store
    )
    # Grid-invariant weight blocks (double buffered by the pipeline).
    fixed = 2 * (pad_s(H) * pad_l(H_out) + pad_s(W) * pad_l(W_out)) * 4

    tc = max(1, min(C, int((budget_bytes - fixed) // max(per_c, 1))))
    # >= 4 total grid steps (>= 2 channel blocks when N == 1) when C allows.
    min_cblocks = min(C, max(1, -(-4 // N)))
    tc = min(tc, max(1, C // min_cblocks))
    while C % tc:  # keep the grid exact
        tc -= 1
    return tc
    # TODO(synk): if even tc=1 exceeds the budget (very large spatial maps),
    # additionally tile H_out with an input-row halo.


# ----------------------------------------------------------------------------
# Pallas kernel: one grid step upsamples a (TC, H, W) channel tile.
# ----------------------------------------------------------------------------
def _interp_kernel(x_ref, wyt_ref, wxt_ref, o_ref):
    # x_ref  : (TC, H, W)          input tile (batch dim squeezed), input dtype
    # wyt_ref: (H, H_out)          row-interp weights (pre-transposed), input dtype
    # wxt_ref: (W, W_out)          col-interp weights (pre-transposed), float32
    # o_ref  : (TC, H_out, W_out)
    tc, h, w = x_ref.shape
    h_out = wyt_ref.shape[1]
    w_out = wxt_ref.shape[1]

    x = x_ref[...]

    # H-pass: one large MXU matmul, contraction over H on the lane dim.
    #   (TC, H, W) -swap-> (TC, W, H) -> (TC*W, H) @ (H, H_out) -> (TC*W, H_out)
    # The leading-dim merge stays a view when W is a multiple of the sublane
    # tile (8 for f32, 16 for bf16); Mosaic relayouts it otherwise.
    xt = jnp.swapaxes(x, 1, 2)
    t = jnp.dot(xt.reshape(tc * w, h), wyt_ref[...],
                preferred_element_type=jnp.float32)

    # W-pass: one large MXU matmul on the f32 intermediate (no bf16
    # re-rounding between the passes), contraction over W on the lane dim.
    #   (TC, W, H_out) -swap-> (TC, H_out, W) -> (TC*H_out, W) @ (W, W_out)
    tt = jnp.swapaxes(t.reshape(tc, w, h_out), 1, 2)
    u = jnp.dot(tt.reshape(tc * h_out, w), wxt_ref[...],
                preferred_element_type=jnp.float32)

    # TODO(synk): for W_out < 128 a lane-dense flattened (TC, H_out*W_out)
    # store would avoid masked vst.msk partial stores; it needs a
    # minor-dim-merging relayout, skipped here for lowering robustness.
    o_ref[...] = u.reshape(tc, h_out, w_out).astype(o_ref.dtype)


# ----------------------------------------------------------------------------
# Wrapper.
# ----------------------------------------------------------------------------
@functools.partial(jax.jit, static_argnames=("scale", "mode", "align_corners"))
def interpolate(x, *, scale=2, mode="bilinear", align_corners=False):
    """Pallas equivalent of Interpolate(scale, mode, align_corners)(x), NCHW."""
    if mode != "bilinear":
        # TODO(synk): only mode="bilinear" (the UNet usage) is implemented.
        raise NotImplementedError("only bilinear mode implemented")
    N, C, H, W = x.shape
    H_out, W_out = int(H * scale), int(W * scale)

    # H-pass weights in the input dtype (MXU takes bf16/f32 directly, f32
    # accumulate); W-pass weights in f32 to match the f32 intermediate.
    wyt = _linear_interp_matrix(H, H_out, align_corners).T.astype(x.dtype)      # (H, H_out)
    wxt = _linear_interp_matrix(W, W_out, align_corners).T.astype(jnp.float32)  # (W, W_out)

    itemsize = jnp.dtype(x.dtype).itemsize
    cap = _vmem_capacity_bytes()
    # ~2-8 MiB working set per step so the pipeline overlaps DMA with compute;
    # hard limit well under physical VMEM (v7x: 64 MiB, v5e/v6e: 128 MiB).
    budget = min(8 * 1024 * 1024, cap // 6)
    vmem_limit = min(64 * 1024 * 1024, (cap * 3) // 5)
    tc = _choose_channel_tile(N, C, H, W, H_out, W_out, itemsize, budget)

    out = pl.pallas_call(
        _interp_kernel,
        out_shape=jax.ShapeDtypeStruct((N, C, H_out, W_out), x.dtype),
        grid_spec=pltpu.PrefetchScalarGridSpec(
            num_scalar_prefetch=0,
            grid=(N, C // tc),
            in_specs=[
                # Batch dim squeezed; last two dims are the full array dims.
                pl.BlockSpec((None, tc, H, W), lambda n, c: (n, c, 0, 0)),
                # Weight blocks are constant across the grid (no re-DMA).
                pl.BlockSpec((H, H_out), lambda n, c: (0, 0)),
                pl.BlockSpec((W, W_out), lambda n, c: (0, 0)),
            ],
            out_specs=pl.BlockSpec((None, tc, H_out, W_out),
                                   lambda n, c: (n, c, 0, 0)),
        ),
        compiler_params=pltpu.CompilerParams(
            # Both axes independent -> shard across TensorCores even when N=1.
            dimension_semantics=("parallel", "parallel"),
            vmem_limit_bytes=vmem_limit,
        ),
    )(x, wyt, wxt)
    return out


# ----------------------------------------------------------------------------
# Independent pure-JAX reference (gather-based, mirrors PyTorch's formula).
# ----------------------------------------------------------------------------
def _ref_bilinear(x, scale, align_corners):
    N, C, H, W = x.shape
    Ho, Wo = int(H * scale), int(W * scale)

    def src(out_size, in_size):
        idx = jnp.arange(out_size, dtype=jnp.float32)
        if align_corners:
            s = idx * (float(in_size - 1) / float(max(out_size - 1, 1)))
        else:
            s = (idx + 0.5) * (float(in_size) / float(out_size)) - 0.5
            s = jnp.maximum(s, 0.0)
        lo = jnp.clip(jnp.floor(s).astype(jnp.int32), 0, in_size - 1)
        hi = jnp.minimum(lo + 1, in_size - 1)
        return lo, hi, s - lo.astype(jnp.float32)

    y0, y1, fy = src(Ho, H)
    x0, x1, fx = src(Wo, W)
    xf = x.astype(jnp.float32)
    top = xf[:, :, y0, :][..., x0] * (1.0 - fx) + xf[:, :, y0, :][..., x1] * fx
    bot = xf[:, :, y1, :][..., x0] * (1.0 - fx) + xf[:, :, y1, :][..., x1] * fx
    out = top * (1.0 - fy)[:, None] + bot * fy[:, None]
    return out.astype(x.dtype)


if __name__ == "__main__":
    key = jax.random.PRNGKey(0)
    N, C, H, W = 2, 4, 16, 16
    x = jax.random.normal(key, (N, C, H, W), dtype=jnp.float32)

    y = interpolate(x, scale=2, mode="bilinear", align_corners=False)
    y = jax.block_until_ready(y)

    assert y.shape == (N, C, 2 * H, 2 * W), y.shape
    y_ref = _ref_bilinear(x, 2, False)
    assert jnp.allclose(y, y_ref, atol=1e-4, rtol=1e-4), float(
        jnp.max(jnp.abs(y - y_ref))
    )
    print("KERNEL_OK")
</pallas_src>

<mosaic_0001>
module attributes {stable_mosaic.version = 11 : i64} {
  func.func @_interp_kernel(%arg0: i32, %arg1: i32, %arg2: memref<1x2x16x16xf32, #tpu.memory_space<vmem>>, %arg3: memref<16x32xf32, #tpu.memory_space<vmem>>, %arg4: memref<16x32xf32, #tpu.memory_space<vmem>>, %arg5: memref<1x2x32x32xf32, #tpu.memory_space<vmem>>) attributes {dimension_semantics = [#tpu.dimension_semantics<parallel>, #tpu.dimension_semantics<parallel>], iteration_bounds = array<i64: 2, 2>, scalar_prefetch = 0 : i64, scratch_operands = 0 : i64, tpu.core_type = #tpu.core_type<tc>, window_params = [{transform_indices = @transform_0, window_bounds = array<i64: 1, 2, 16, 16>}, {pipeline_mode = #tpu.pipeline_mode<synchronous>, transform_indices = @transform_1, window_bounds = array<i64: 16, 32>}, {pipeline_mode = #tpu.pipeline_mode<synchronous>, transform_indices = @transform_2, window_bounds = array<i64: 16, 32>}, {transform_indices = @transform_3, window_bounds = array<i64: 1, 2, 32, 32>}]} {
    %c0 = arith.constant 0 : index
    %c0_0 = arith.constant 0 : index
    %c0_1 = arith.constant 0 : index
    %c0_2 = arith.constant 0 : index
    %0 = vector.load %arg2[%c0, %c0_0, %c0_1, %c0_2] : memref<1x2x16x16xf32, #tpu.memory_space<vmem>>, vector<1x2x16x16xf32>
    %1 = vector.shape_cast %0 : vector<1x2x16x16xf32> to vector<2x16x16xf32>
    %2 = tpu.transpose %1, [0, 2, 1] : vector<2x16x16xf32> -> vector<2x16x16xf32>
    %3 = vector.shape_cast %2 : vector<2x16x16xf32> to vector<32x16xf32>
    %c0_3 = arith.constant 0 : index
    %c0_4 = arith.constant 0 : index
    %4 = vector.load %arg3[%c0_3, %c0_4] : memref<16x32xf32, #tpu.memory_space<vmem>>, vector<16x32xf32>
    %cst = arith.constant dense<0.000000e+00> : vector<32x32xf32>
    %5 = tpu.matmul %3, %4, %cst {dimension_numbers = #tpu.dot_dimension_numbers<[1], [0], [0], [1], [0, 0, 1, 1], [], []>} : vector<32x16xf32>, vector<16x32xf32>, vector<32x32xf32> -> vector<32x32xf32>
    %6 = vector.shape_cast %5 : vector<32x32xf32> to vector<2x16x32xf32>
    %7 = tpu.transpose %6, [0, 2, 1] : vector<2x16x32xf32> -> vector<2x32x16xf32>
    %8 = vector.shape_cast %7 : vector<2x32x16xf32> to vector<64x16xf32>
    %c0_5 = arith.constant 0 : index
    %c0_6 = arith.constant 0 : index
    %9 = vector.load %arg4[%c0_5, %c0_6] : memref<16x32xf32, #tpu.memory_space<vmem>>, vector<16x32xf32>
    %cst_7 = arith.constant dense<0.000000e+00> : vector<64x32xf32>
    %10 = tpu.matmul %8, %9, %cst_7 {dimension_numbers = #tpu.dot_dimension_numbers<[1], [0], [0], [1], [0, 0, 1, 1], [], []>} : vector<64x16xf32>, vector<16x32xf32>, vector<64x32xf32> -> vector<64x32xf32>
    %11 = vector.shape_cast %10 : vector<64x32xf32> to vector<2x32x32xf32>
    %c0_8 = arith.constant 0 : index
    %c0_9 = arith.constant 0 : index
    %c0_10 = arith.constant 0 : index
    %c0_11 = arith.constant 0 : index
    %12 = vector.load %arg5[%c0_8, %c0_9, %c0_10, %c0_11] : memref<1x2x32x32xf32, #tpu.memory_space<vmem>>, vector<1x2x32x32xf32>
    %13 = vector.shape_cast %12 : vector<1x2x32x32xf32> to vector<2x32x32xf32>
    %14 = vector.shape_cast %11 : vector<2x32x32xf32> to vector<1x2x32x32xf32>
    tpu.vector_store %arg5[%c0_8, %c0_9, %c0_10, %c0_11], %14 {strides = array<i32>} : memref<1x2x32x32xf32, #tpu.memory_space<vmem>>, vector<1x2x32x32xf32>,
    return
  }
  func.func @transform_0(%arg0: i32, %arg1: i32) -> (i32, i32, i32, i32) {
    %c0_i32 = arith.constant 0 : i32
    %c0_i32_0 = arith.constant 0 : i32
    %c0_i32_1 = arith.constant 0 : i32
    return %arg0, %arg1, %c0_i32, %c0_i32_0 : i32, i32, i32, i32
  }
  func.func @transform_1(%arg0: i32, %arg1: i32) -> (i32, i32) {
    %c0_i32 = arith.constant 0 : i32
    %c0_i32_0 = arith.constant 0 : i32
    %c0_i32_1 = arith.constant 0 : i32
    return %c0_i32, %c0_i32_0 : i32, i32
  }
  func.func @transform_2(%arg0: i32, %arg1: i32) -> (i32, i32) {
    %c0_i32 = arith.constant 0 : i32
    %c0_i32_0 = arith.constant 0 : i32
    %c0_i32_1 = arith.constant 0 : i32
    return %c0_i32, %c0_i32_0 : i32, i32
  }
  func.func @transform_3(%arg0: i32, %arg1: i32) -> (i32, i32, i32, i32) {
    %c0_i32 = arith.constant 0 : i32
    %c0_i32_0 = arith.constant 0 : i32
    %c0_i32_1 = arith.constant 0 : i32
    return %arg0, %arg1, %c0_i32, %c0_i32_0 : i32, i32, i32, i32
  }
}

</mosaic_0001>

<llo_original>
// kernel: interpolate.1
$region0: #{interpolate.1}
  #allocation0 [shape = 'u32[]', space=smem, size = 0x4, offset = 0x4, fixed_abs, tag = 'smem constant byte address 0x4 - core index']
  #allocation1 [shape = 'u32[72,128]{1,0:T(1,128)}', space=vmem, size = 0x9000, scoped, tag = 'internal scratch']
  %s0 = inlined_call_operand.vmem [shape: f32[2,4,16,16], index: 0, kind: input, shape index: {}]
  %s1 = inlined_call_operand.vmem [shape: f32[16,32], index: 1, kind: input, shape index: {}, may-alias: {1,2}]
  %s2 = inlined_call_operand.vmem [shape: f32[16,32], index: 2, kind: input, shape index: {}, may-alias: {1,2}]
  %s3 = inlined_call_operand.hbm [shape: f32[2,4,32,32], index: 3, kind: output, shape index: {}]
  %s4 = sld [smem:[#allocation0]]
  $region45: #{interpolate.1} parent=0
    _
  %s6 = ssub.s32 1, %s4
  %s7 = scalar_select 0, %s6, %s4
  $region1: #{interpolate.1} parent=0
    #allocation2 [shape = 'u8[65536]{0}', space=vmem, size = 0x10000, scoped, tag = 'output window, operand 0']
    #allocation3 [shape = 's32[2]{0}', space=sflag, size = 0x8, scoped, tag = 'scoped memory for interpolate.1']
    %8 = vsyncpa [#allocation3], 0
    %s9 = scalar_lea.sflag [#allocation3], 1
    %10 = vsyncpa %s9, 0
    loop: start=0, step=1, limit=6
    $region2: #{interpolate.1} parent=1 // loop_pre_header
      _
    $region3: #{interpolate.1} parent=1 // loop_header
      %s12 = sphi 0, %s16
      %p13 = scmp.ge.s32.totalorder %s12, 6
      %s19 = sphi 0, %s31
      %s20 = sphi 0, %s27
      %s21 = sphi 0, %s19
      %s22 = sphi 0, %s20
      %s23 = sphi 0, %s21
      %s24 = sphi 0, %s22
      %s36 = sphi 0, %s38
      %s39 = sphi 0, %s36
      %s40 = sphi 0, %s39
      %s56 = sphi 0, %s40
      %s60 = sphi 0, %s60
      %s62 = sphi 0, %s60
      %s63 = sphi 0, %s62
      %s77 = sphi 0, %s63
      %s81 = sphi 0, %s81
      %s83 = sphi 0, %s81
      %s84 = sphi 0, %s83
      %s98 = sphi 0, %s84
      %s106 = sphi 0, %s108
      %s109 = sphi 0, %s106
      %s110 = sphi 0, %s109
      %s126 = sphi 0, %s110
    $region4: #{interpolate.1} parent=1 // loop_header_branch
      %15 = sbr.rel (%p13) target = $region8
    $region5: #{interpolate.1} parent=1 // loop_body
      %s17 = ssub.s32 %s12, 1
      %s18 = ssub.s32 %s12, 2
      %s25 = sadd.s32 1, %s20
      %p26 = scmp.ge.s32.totalorder %s25, 2
      %s27 = scalar_select %p26, 0, %s25
      %s28 = sadd.s32 1, %s19
      %s29 = scalar_select %p26, %s28, %s19
      %p30 = scmp.ge.s32.totalorder %s29, 2
      %s31 = scalar_select %p30, 0, %s29
      %s32 = ssub.s32 %s19, %s31
      %s33 = ssub.s32 %s20, %s27
      %s34 = sor.u32 %s32, %s33
      %p35 = scmp.eq.s32.totalorder %s34, 0
      %s37 = sadd.s32 %s36, 1
      %s38 = scalar_select %p35, %s36, %s37
      %p41 = pneg %p35
      %p42 = scmp.eq.s32.totalorder %s12, 3
      %p43 = por %p41, %p42
      %p44 = scmp.ne.s32.totalorder %s36, %s39
      %p45 = scmp.eq.s32.totalorder %s12, 0
      %p46 = por %p44, %p45
      %p47 = scmp.ne.s32.totalorder %s36, %s39
      %p48 = scmp.eq.s32.totalorder %s17, 3
      %p49 = por %p47, %p48
      %p50 = scmp.ne.s32.totalorder %s39, %s40
      %p51 = scmp.eq.s32.totalorder %s17, 0
      %p52 = por %p50, %p51
      %p53 = scmp.ne.s32.totalorder %s39, %s40
      %p54 = scmp.eq.s32.totalorder %s18, 3
      %p55 = por %p53, %p54
      %p57 = scmp.ne.s32.totalorder %s40, %s56
      %p58 = scmp.eq.s32.totalorder %s18, 0
      %p59 = por %p57, %p58
      %s61 = sadd.s32 %s60, 1
      %p64 = scmp.eq.s32.totalorder %s12, 3
      %p65 = scmp.ne.s32.totalorder %s60, %s62
      %p66 = scmp.eq.s32.totalorder %s12, 0
      %p67 = por %p65, %p66
      %p68 = scmp.ne.s32.totalorder %s60, %s62
      %p69 = scmp.eq.s32.totalorder %s17, 3
      %p70 = por %p68, %p69
      %p71 = scmp.ne.s32.totalorder %s62, %s63
      %p72 = scmp.eq.s32.totalorder %s17, 0
      %p73 = por %p71, %p72
      %p74 = scmp.ne.s32.totalorder %s62, %s63
      %p75 = scmp.eq.s32.totalorder %s18, 3
      %p76 = por %p74, %p75
      %p78 = scmp.ne.s32.totalorder %s63, %s77
      %p79 = scmp.eq.s32.totalorder %s18, 0
      %p80 = por %p78, %p79
      %s82 = sadd.s32 %s81, 1
      %p85 = scmp.eq.s32.totalorder %s12, 3
      %p86 = scmp.ne.s32.totalorder %s81, %s83
      %p87 = scmp.eq.s32.totalorder %s12, 0
      %p88 = por %p86, %p87
      %p89 = scmp.ne.s32.totalorder %s81, %s83
      %p90 = scmp.eq.s32.totalorder %s17, 3
      %p91 = por %p89, %p90
      %p92 = scmp.ne.s32.totalorder %s83, %s84
      %p93 = scmp.eq.s32.totalorder %s17, 0
      %p94 = por %p92, %p93
      %p95 = scmp.ne.s32.totalorder %s83, %s84
      %p96 = scmp.eq.s32.totalorder %s18, 3
      %p97 = por %p95, %p96
      %p99 = scmp.ne.s32.totalorder %s84, %s98
      %p100 = scmp.eq.s32.totalorder %s18, 0
      %p101 = por %p99, %p100
      %s102 = ssub.s32 %s19, %s31
      %s103 = ssub.s32 %s20, %s27
      %s104 = sor.u32 %s102, %s103
      %p105 = scmp.eq.s32.totalorder %s104, 0
      %s107 = sadd.s32 %s106, 1
      %s108 = scalar_select %p105, %s106, %s107
      %p111 = pneg %p105
      %p112 = scmp.eq.s32.totalorder %s12, 3
      %p113 = por %p111, %p112
      %p114 = scmp.ne.s32.totalorder %s106, %s109
      %p115 = scmp.eq.s32.totalorder %s12, 0
      %p116 = por %p114, %p115
      %p117 = scmp.ne.s32.totalorder %s106, %s109
      %p118 = scmp.eq.s32.totalorder %s17, 3
      %p119 = por %p117, %p118
      %p120 = scmp.ne.s32.totalorder %s109, %s110
      %p121 = scmp.eq.s32.totalorder %s17, 0
      %p122 = por %p120, %p121
      %p123 = scmp.ne.s32.totalorder %s109, %s110
      %p124 = scmp.eq.s32.totalorder %s18, 3
      %p125 = por %p123, %p124
      %p127 = scmp.ne.s32.totalorder %s110, %s126
      %p128 = scmp.eq.s32.totalorder %s18, 0
      %p129 = por %p127, %p128
      %p130 = scmp.le.s32.totalorder 1, %s12
      %p131 = scmp.lt.s32.totalorder %s12, 5
      %p132 = pnand %p130, %p131
      %p133 = pneg %p132
      // Predicated region
      $region9: #{interpolate.1} parent=5 // pred_check
        _
      $region10: #{interpolate.1} parent=5 // pred_check_branch
        %135 = sbr.rel (%p132) target = $region12
      $region11: #{interpolate.1} parent=5 // pred_region
        %s136 = ssub.s32 %s12, 1
        // Predicated region
        $region13: #{interpolate.1} parent=11 // pred_check
          %p137 = pneg %p73
        $region14: #{interpolate.1} parent=11 // pred_check_branch
          %139 = sbr.rel (%p137) target = $region16
        $region15: #{interpolate.1} parent=11 // pred_region
          _
        $region16: #{interpolate.1} parent=11 // pred_fallthru
          _
        // Predicated region
        $region17: #{interpolate.1} parent=11 // pred_check
          %p140 = pneg %p94
        $region18: #{interpolate.1} parent=11 // pred_check_branch
          %142 = sbr.rel (%p140) target = $region20
        $region19: #{interpolate.1} parent=11 // pred_region
          _
        $region20: #{interpolate.1} parent=11 // pred_fallthru
          _
      $region12: #{interpolate.1} parent=5 // pred_fallthru
        _
      %p143 = scmp.lt.s32.totalorder %s12, 4
      // Predicated region
      $region21: #{interpolate.1} parent=5 // pred_check
        %p144 = pneg %p143
      $region22: #{interpolate.1} parent=5 // pred_check_branch
        %146 = sbr.rel (%p144) target = $region24
      $region23: #{interpolate.1} parent=5 // pred_region
        // Predicated region
        $region25: #{interpolate.1} parent=23 // pred_check
          %p147 = pneg %p46
        $region26: #{interpolate.1} parent=23 // pred_check_branch
          %149 = sbr.rel (%p147) target = $region28
        $region27: #{interpolate.1} parent=23 // pred_region
          %s150 = smul.u32 2, %s20
          %p151 = scmp.lt.s32.totalorder %s19, 1
          %s152 = scalar_select %p151, %s19, 1
          %p153 = scmp.lt.s32.totalorder %s150, 3
          %s154 = scalar_select %p153, %s150, 3
          %s155 = smul.addr %s154, 2
          %s156 = smul.addr %s152, 8
          %s157 = sadd.s32 %s155, %s156
          %s158 = smul.addr %s157, 8
          %s159 = scalar_lea.vmem %s0, %s158
          %s160 = smul.u32 2, %s20
        $region28: #{interpolate.1} parent=23 // pred_fallthru
          _
      $region24: #{interpolate.1} parent=5 // pred_fallthru
        _
      %p161 = scmp.le.s32.totalorder 1, %s12
      %p162 = scmp.lt.s32.totalorder %s12, 5
      %p163 = pnand %p161, %p162
      %p164 = pneg %p163
      // Predicated region
      $region29: #{interpolate.1} parent=5 // pred_check
        _
      $region30: #{interpolate.1} parent=5 // pred_check_branch
        %166 = sbr.rel (%p163) target = $region32
      $region31: #{interpolate.1} parent=5 // pred_region
        %s167 = ssub.s32 %s12, 1
        %s168 = smul.u32 2, %s22
        %p169 = scmp.lt.s32.totalorder %s21, 1
        %s170 = scalar_select %p169, %s21, 1
        %p171 = scmp.lt.s32.totalorder %s168, 3
        %s172 = scalar_select %p171, %s168, 3
        %s173 = smul.addr %s172, 2
        %s174 = smul.addr %s170, 8
        %s175 = sadd.s32 %s173, %s174
        %s176 = smul.addr %s175, 8
        %s177 = scalar_lea.vmem %s0, %s176
        %p178 = pneg %p52
        %p179 = pneg %p49
        %p180 = pneg %p73
        %p181 = pneg %p70
        %p182 = pneg %p94
        %p183 = pneg %p91
        %p184 = pneg %p122
        %p185 = pneg %p119
        %s186 = sand.u32 %s109, 1
        %s187 = scalar_lea.sflag [#allocation3], %s186
        %s188 = sand.u32 %s109, 1
        %s189 = smul.addr %s188, 64
        %s190 = scalar_lea.vmem [#allocation2], %s189
        %s191 = smul.u32 2, %s22
        %p192 = scmp.lt.s32.totalorder %s21, 1
        %s193 = scalar_select %p192, %s21, 1
        %p194 = scmp.lt.s32.totalorder %s191, 3
        %s195 = scalar_select %p194, %s191, 3
        %s196 = smul.addr %s195, 2
        %s197 = smul.addr %s193, 8
        %s198 = sadd.s32 %s196, %s197
        %s199 = smul.addr %s198, 8
        %s200 = scalar_lea.vmem %s0, %s199
        %s201 = smul.u32 2, %s22
        %s202 = smul.u32 2, %s22
        %v203 = vld [vmem:[%s200] sm:$0xff]
        %v204 = vld [vmem:[%s200 + $0x8] sm:$0xff]
        %v205 = vld [vmem:[%s200 + $0x10] sm:$0xff]
        %v206 = vld [vmem:[%s200 + $0x18] sm:$0xff]
        %207 = vxpose.xlu0.b32.start [1/16] %v203, 128
        %208 = vxpose.xlu0.b32.cont [2/16] %v204, 128
        %209 = vxpose.xlu0.b32.cont [3/16] 0.0, 128
        %210 = vxpose.xlu0.b32.cont [4/16] 0.0, 128
        %211 = vxpose.xlu0.b32.cont [5/16] 0.0, 128
        %212 = vxpose.xlu0.b32.cont [6/16] 0.0, 128
        %213 = vxpose.xlu0.b32.cont [7/16] 0.0, 128
        %214 = vxpose.xlu0.b32.cont [8/16] 0.0, 128
        %215 = vxpose.xlu0.b32.cont [9/16] 0.0, 128
        %216 = vxpose.xlu0.b32.cont [10/16] 0.0, 128
        %217 = vxpose.xlu0.b32.cont [11/16] 0.0, 128
        %218 = vxpose.xlu0.b32.cont [12/16] 0.0, 128
        %219 = vxpose.xlu0.b32.cont [13/16] 0.0, 128
        %220 = vxpose.xlu0.b32.cont [14/16] 0.0, 128
        %221 = vxpose.xlu0.b32.cont [15/16] 0.0, 128
        %222 = vxpose.xlu0.b32.end [16/16] 0.0, 128
        %v223 = vpop.trf.xlu0
        %v224 = vpop.trf.xlu0
        %v225 = vpop.trf.xlu0
        %v226 = vpop.trf.xlu0
        %v227 = vpop.trf.xlu0
        %v228 = vpop.trf.xlu0
        %v229 = vpop.trf.xlu0
        %v230 = vpop.trf.xlu0
        %v231 = vpop.trf.xlu0
        %v232 = vpop.trf.xlu0
        %v233 = vpop.trf.xlu0
        %v234 = vpop.trf.xlu0
        %v235 = vpop.trf.xlu0
        %v236 = vpop.trf.xlu0
        %v237 = vpop.trf.xlu0
        %v238 = vpop.trf.xlu0
        %239 = vxpose.xlu0.b32.start [1/16] %v205, 128
        %240 = vxpose.xlu0.b32.cont [2/16] %v206, 128
        %241 = vxpose.xlu0.b32.cont [3/16] 0.0, 128
        %242 = vxpose.xlu0.b32.cont [4/16] 0.0, 128
        %243 = vxpose.xlu0.b32.cont [5/16] 0.0, 128
        %244 = vxpose.xlu0.b32.cont [6/16] 0.0, 128
        %245 = vxpose.xlu0.b32.cont [7/16] 0.0, 128
        %246 = vxpose.xlu0.b32.cont [8/16] 0.0, 128
        %247 = vxpose.xlu0.b32.cont [9/16] 0.0, 128
        %248 = vxpose.xlu0.b32.cont [10/16] 0.0, 128
        %249 = vxpose.xlu0.b32.cont [11/16] 0.0, 128
        %250 = vxpose.xlu0.b32.cont [12/16] 0.0, 128
        %251 = vxpose.xlu0.b32.cont [13/16] 0.0, 128
        %252 = vxpose.xlu0.b32.cont [14/16] 0.0, 128
        %253 = vxpose.xlu0.b32.cont [15/16] 0.0, 128
        %254 = vxpose.xlu0.b32.end [16/16] 0.0, 128
        %v255 = vpop.trf.xlu0
        %v256 = vpop.trf.xlu0
        %v257 = vpop.trf.xlu0
        %v258 = vpop.trf.xlu0
        %v259 = vpop.trf.xlu0
        %v260 = vpop.trf.xlu0
        %v261 = vpop.trf.xlu0
        %v262 = vpop.trf.xlu0
        %v263 = vpop.trf.xlu0
        %v264 = vpop.trf.xlu0
        %v265 = vpop.trf.xlu0
        %v266 = vpop.trf.xlu0
        %v267 = vpop.trf.xlu0
        %v268 = vpop.trf.xlu0
        %v269 = vpop.trf.xlu0
        %v270 = vpop.trf.xlu0
        %v271 = vld [vmem:[%s1] sm:$0xff]
        %v272 = vld [vmem:[%s1 + $0x8] sm:$0xff]
        %vm273 = vcmask 130048
        %v275 = vsel %vm273, %v223, 0
        %v278 = vsel %vm273, %v224, 0
        %v281 = vsel %vm273, %v255, 0
        %v284 = vsel %vm273, %v256, 0
        %286 = vmatpush.msra.mxu0 0.0
        %287 = vmatpush.msra.mxu0 0.0
        %288 = vmatpush.msra.mxu0 0.0
        %289 = vmatpush.msra.mxu0 0.0
        %290 = vmatpush.msra.mxu0 0.0
        %291 = vmatpush.msra.mxu0 0.0
        %292 = vmatpush.msra.mxu0 0.0
        %293 = vmatpush.msra.mxu0 0.0
        %294 = vmatpush.msra.mxu0 0.0
        %295 = vmatpush.msra.mxu0 0.0
        %296 = vmatpush.msra.mxu0 0.0
        %297 = vmatpush.msra.mxu0 0.0
        %298 = vmatpush.msra.mxu0 0.0
        %299 = vmatpush.msra.mxu0 0.0
        %300 = vmatpush.msra.mxu0 %v272
        %301 = vmatpush.msra.mxu0 %v271
        %302 = vmatmul.f32.gmra.mxu0 %v275
        %v303 = vpop.f32.mrf.mxu0
        %v304 = vadd.f32 0.0, %v303
        %305 = vmatmul.f32.gmra.mxu0 %v278
        %v306 = vpop.f32.mrf.mxu0
        %v307 = vadd.f32 0.0, %v306
        %308 = vmatmul.f32.gmra.mxu0 %v281
        %v309 = vpop.f32.mrf.mxu0
        %v310 = vadd.f32 0.0, %v309
        %311 = vmatmul.f32.gmra.mxu0 %v284
        %v312 = vpop.f32.mrf.mxu0
        %v313 = vadd.f32 0.0, %v312
        %314 = vdwg.mxu0
        %315 = vxpose.xlu0.b32.start [1/16] %v304, 128
        %316 = vxpose.xlu0.b32.cont [2/16] %v307, 128
        %317 = vxpose.xlu0.b32.cont [3/16] 0.0, 128
        %318 = vxpose.xlu0.b32.cont [4/16] 0.0, 128
        %319 = vxpose.xlu0.b32.cont [5/16] 0.0, 128
        %320 = vxpose.xlu0.b32.cont [6/16] 0.0, 128
        %321 = vxpose.xlu0.b32.cont [7/16] 0.0, 128
        %322 = vxpose.xlu0.b32.cont [8/16] 0.0, 128
        %323 = vxpose.xlu0.b32.cont [9/16] 0.0, 128
        %324 = vxpose.xlu0.b32.cont [10/16] 0.0, 128
        %325 = vxpose.xlu0.b32.cont [11/16] 0.0, 128
        %326 = vxpose.xlu0.b32.cont [12/16] 0.0, 128
        %327 = vxpose.xlu0.b32.cont [13/16] 0.0, 128
        %328 = vxpose.xlu0.b32.cont [14/16] 0.0, 128
        %329 = vxpose.xlu0.b32.cont [15/16] 0.0, 128
        %330 = vxpose.xlu0.b32.end [16/16] 0.0, 128
        %v331 = vpop.trf.xlu0
        %v332 = vpop.trf.xlu0
        %v333 = vpop.trf.xlu0
        %v334 = vpop.trf.xlu0
        %v335 = vpop.trf.xlu0
        %v336 = vpop.trf.xlu0
        %v337 = vpop.trf.xlu0
        %v338 = vpop.trf.xlu0
        %v339 = vpop.trf.xlu0
        %v340 = vpop.trf.xlu0
        %v341 = vpop.trf.xlu0
        %v342 = vpop.trf.xlu0
        %v343 = vpop.trf.xlu0
        %v344 = vpop.trf.xlu0
        %v345 = vpop.trf.xlu0
        %v346 = vpop.trf.xlu0
        %347 = vxpose.xlu0.b32.start [1/16] %v310, 128
        %348 = vxpose.xlu0.b32.cont [2/16] %v313, 128
        %349 = vxpose.xlu0.b32.cont [3/16] 0.0, 128
        %350 = vxpose.xlu0.b32.cont [4/16] 0.0, 128
        %351 = vxpose.xlu0.b32.cont [5/16] 0.0, 128
        %352 = vxpose.xlu0.b32.cont [6/16] 0.0, 128
        %353 = vxpose.xlu0.b32.cont [7/16] 0.0, 128
        %354 = vxpose.xlu0.b32.cont [8/16] 0.0, 128
        %355 = vxpose.xlu0.b32.cont [9/16] 0.0, 128
        %356 = vxpose.xlu0.b32.cont [10/16] 0.0, 128
        %357 = vxpose.xlu0.b32.cont [11/16] 0.0, 128
        %358 = vxpose.xlu0.b32.cont [12/16] 0.0, 128
        %359 = vxpose.xlu0.b32.cont [13/16] 0.0, 128
        %360 = vxpose.xlu0.b32.cont [14/16] 0.0, 128
        %361 = vxpose.xlu0.b32.cont [15/16] 0.0, 128
        %362 = vxpose.xlu0.b32.end [16/16] 0.0, 128
        %v363 = vpop.trf.xlu0
        %v364 = vpop.trf.xlu0
        %v365 = vpop.trf.xlu0
        %v366 = vpop.trf.xlu0
        %v367 = vpop.trf.xlu0
        %v368 = vpop.trf.xlu0
        %v369 = vpop.trf.xlu0
        %v370 = vpop.trf.xlu0
        %v371 = vpop.trf.xlu0
        %v372 = vpop.trf.xlu0
        %v373 = vpop.trf.xlu0
        %v374 = vpop.trf.xlu0
        %v375 = vpop.trf.xlu0
        %v376 = vpop.trf.xlu0
        %v377 = vpop.trf.xlu0
        %v378 = vpop.trf.xlu0
        %v379 = vld [vmem:[%s2] sm:$0xff]
        %v380 = vld [vmem:[%s2 + $0x8] sm:$0xff]
        %v382 = vsel %vm273, %v331, 0
        %v385 = vsel %vm273, %v332, 0
        %v388 = vsel %vm273, %v333, 0
        %v391 = vsel %vm273, %v334, 0
        %v394 = vsel %vm273, %v363, 0
        %v397 = vsel %vm273, %v364, 0
        %v400 = vsel %vm273, %v365, 0
        %v403 = vsel %vm273, %v366, 0
        %405 = vmatpush.msra.mxu0 0.0
        %406 = vmatpush.msra.mxu0 0.0
        %407 = vmatpush.msra.mxu0 0.0
        %408 = vmatpush.msra.mxu0 0.0
        %409 = vmatpush.msra.mxu0 0.0
        %410 = vmatpush.msra.mxu0 0.0
        %411 = vmatpush.msra.mxu0 0.0
        %412 = vmatpush.msra.mxu0 0.0
        %413 = vmatpush.msra.mxu0 0.0
        %414 = vmatpush.msra.mxu0 0.0
        %415 = vmatpush.msra.mxu0 0.0
        %416 = vmatpush.msra.mxu0 0.0
        %417 = vmatpush.msra.mxu0 0.0
        %418 = vmatpush.msra.mxu0 0.0
        %419 = vmatpush.msra.mxu0 %v380
        %420 = vmatpush.msra.mxu0 %v379
        %421 = vmatmul.f32.gmra.mxu0 %v382
        %v422 = vpop.f32.mrf.mxu0
        %v423 = vadd.f32 0.0, %v422
        %424 = vmatmul.f32.gmra.mxu0 %v385
        %v425 = vpop.f32.mrf.mxu0
        %v426 = vadd.f32 0.0, %v425
        %427 = vmatmul.f32.gmra.mxu0 %v388
        %v428 = vpop.f32.mrf.mxu0
        %v429 = vadd.f32 0.0, %v428
        %430 = vmatmul.f32.gmra.mxu0 %v391
        %v431 = vpop.f32.mrf.mxu0
        %v432 = vadd.f32 0.0, %v431
        %433 = vmatmul.f32.gmra.mxu0 %v394
        %v434 = vpop.f32.mrf.mxu0
        %v435 = vadd.f32 0.0, %v434
        %436 = vmatmul.f32.gmra.mxu0 %v397
        %v437 = vpop.f32.mrf.mxu0
        %v438 = vadd.f32 0.0, %v437
        %439 = vmatmul.f32.gmra.mxu0 %v400
        %v440 = vpop.f32.mrf.mxu0
        %v441 = vadd.f32 0.0, %v440
        %442 = vmatmul.f32.gmra.mxu0 %v403
        %v443 = vpop.f32.mrf.mxu0
        %v444 = vadd.f32 0.0, %v443
        %445 = vdwg.mxu0
        %vm446 = vcmask 261120
        %447 = vst.msk [vmem:[%s190] sm:$0xff] %vm446, %v423
        %448 = vst.msk [vmem:[%s190 + $0x8] sm:$0xff] %vm446, %v426
        %449 = vst.msk [vmem:[%s190 + $0x10] sm:$0xff] %vm446, %v429
        %450 = vst.msk [vmem:[%s190 + $0x18] sm:$0xff] %vm446, %v432
        %451 = vst.msk [vmem:[%s190 + $0x20] sm:$0xff] %vm446, %v435
        %452 = vst.msk [vmem:[%s190 + $0x28] sm:$0xff] %vm446, %v438
        %453 = vst.msk [vmem:[%s190 + $0x30] sm:$0xff] %vm446, %v441
        %454 = vst.msk [vmem:[%s190 + $0x38] sm:$0xff] %vm446, %v444
        %s455 = sand.u32 %s109, 1
        %s456 = scalar_lea.sflag [#allocation3], %s455
        %s457 = sand.u32 %s109, 1
        %s458 = smul.addr %s457, 64
        %s459 = scalar_lea.vmem [#allocation2], %s458
        // Predicated region
        $region33: #{interpolate.1} parent=31 // pred_check
          %p460 = pneg %p119
        $region34: #{interpolate.1} parent=31 // pred_check_branch
          %462 = sbr.rel (%p460) target = $region36
        $region35: #{interpolate.1} parent=31 // pred_region
          %s463 = smul.u32 2, %s22
          %465 = vsyncadd %s456, 0
          %s466 = smul.addr %s463, 4
          %s467 = smul.addr %s21, 16
          %s468 = sadd.s32 %s466, %s467
          %s469 = smul.addr %s468, 8
          %s470 = scalar_lea.hbm %s3, %s469
          %s471 = sshll.u32 %s459, 4
          %s472 = int_to_ptr.vmem [resolvable:$true] %s471
          %s473 = sshll.u32 %s470, 4
          %s474 = int_to_ptr.hbm [resolvable:$true] %s473
          %479 = dma.vmem_to_hbm [thread:$0]  %s472, 1024, %s474, %s456, 128, 128, 8
        $region36: #{interpolate.1} parent=31 // pred_fallthru
          _
      $region32: #{interpolate.1} parent=5 // pred_fallthru
        _
      %p480 = scmp.le.s32.totalorder 2, %s12
      // Predicated region
      $region37: #{interpolate.1} parent=5 // pred_check
        %p481 = pneg %p480
      $region38: #{interpolate.1} parent=5 // pred_check_branch
        %483 = sbr.rel (%p481) target = $region40
      $region39: #{interpolate.1} parent=5 // pred_region
        %s484 = ssub.s32 %s12, 2
        // Predicated region
        $region41: #{interpolate.1} parent=39 // pred_check
          %p485 = pneg %p125
        $region42: #{interpolate.1} parent=39 // pred_check_branch
          %487 = sbr.rel (%p485) target = $region44
        $region43: #{interpolate.1} parent=39 // pred_region
          %s488 = sand.u32 %s110, 1
          %s489 = scalar_lea.sflag [#allocation3], %s488
          %s490 = sand.u32 %s110, 1
          %s491 = smul.addr %s490, 64
          %s492 = scalar_lea.vmem [#allocation2], %s491
          %494 = dma.done %s489, 1024
        $region44: #{interpolate.1} parent=39 // pred_fallthru
          _
      $region40: #{interpolate.1} parent=5 // pred_fallthru
        _
    $region6: #{interpolate.1} parent=1 // loop_footer
      %s16 = sadd.s32 1, %s12
    $region7: #{interpolate.1} parent=1 // loop_footer_branch
      %11 = sbr.rel target = $region3
    $region8: #{interpolate.1} parent=1 // loop_exit
      _
    %495 = vsyncpa [#allocation3], 1
    %s496 = scalar_lea.sflag [#allocation3], 1
    %497 = vsyncpa %s496, 1

</llo_original>
